<compile_context>
chip_gen: v7x
topology: tpu7x:2x2x1
jax: 0.10.0
libtpu: 0.0.40
codegen_flags: <defaults>
</compile_context>

<pallas_src>
import functools

import jax
import jax.numpy as jnp
from jax.experimental import pallas as pl
from jax.experimental.pallas import tpu as pltpu


def _router_kernel(x_ref, g1_ref, b1_ref, w1_ref, c1_ref,
                   g2_ref, b2_ref, w2_ref, c2_ref, o_ref):
    # x: (D, cols) — features on sublanes, rows on lanes.
    x = x_ref[...].astype(jnp.float32)

    # F.normalize(x, dim=feature), p=2, eps=1e-12:
    #   x / max(||x||, 1e-12) == x * rsqrt(max(sum(x^2), 1e-24))   (EUP, no VALU divide)
    ssq = jnp.sum(x * x, axis=0, keepdims=True)
    x = x * jax.lax.rsqrt(jnp.maximum(ssq, 1e-24))

    # LayerNorm over D (per column), eps=1e-5, biased variance.
    mu = jnp.mean(x, axis=0, keepdims=True)
    xc = x - mu
    var = jnp.mean(xc * xc, axis=0, keepdims=True)
    h = xc * jax.lax.rsqrt(var + 1e-5)
    h = h * g1_ref[...] + b1_ref[...]

    # Linear(D -> hidden): (hidden, D) @ (D, cols) + bias(hidden, 1)
    h = jnp.dot(w1_ref[...], h, preferred_element_type=jnp.float32) + c1_ref[...]

    # Exact GELU (erf form; PyTorch nn.GELU default).
    h = 0.5 * h * (1.0 + jax.lax.erf(h * 0.7071067811865476))

    # (Dropout is a no-op at inference.)

    # LayerNorm over hidden (per column), eps=1e-5.
    mu2 = jnp.mean(h, axis=0, keepdims=True)
    hc = h - mu2
    var2 = jnp.mean(hc * hc, axis=0, keepdims=True)
    h = hc * jax.lax.rsqrt(var2 + 1e-5)
    h = h * g2_ref[...] + b2_ref[...]

    # Linear(hidden -> E): (E, hidden) @ (hidden, cols) + bias(E, 1)
    logits = jnp.dot(w2_ref[...], h, preferred_element_type=jnp.float32) + c2_ref[...]

    # gates = exp(log_softmax(logits / 0.1)) == softmax(logits * 10) over experts (axis 0).
    z = logits * 10.0
    z = z - jnp.max(z, axis=0, keepdims=True)
    e = jnp.exp(z)
    gates = e * pl.reciprocal(jnp.sum(e, axis=0, keepdims=True), approx=True)

    # torch.clamp(gates, min=1e-6, max=1.0)
    o_ref[...] = jnp.clip(gates, 1e-6, 1.0).astype(o_ref.dtype)


@functools.partial(jax.jit, static_argnames=("block_cols",))
def expert_router_forward(x, params, block_cols=1024):
    """x: (B, H, S, D) float32. Returns gates: (B, H, S, num_experts)."""
    B, H, S, D = x.shape
    g1, b1, w1t, c1, g2, b2, w2t, c2 = params
    hidden = w1t.shape[0]
    num_experts = w2t.shape[0]

    n_rows = B * H * S

    # Transposed working layout: rows on the lane axis.
    xT = x.reshape(n_rows, D).T                     # (D, n_rows)

    # Pick the block width: big (amortize per-step overhead, lane-dense stores),
    # but no larger than the (lane-aligned) problem. Pad columns so the grid covers
    # arbitrary B*H*S; padded zero columns produce finite garbage that is sliced off.
    bc = block_cols
    n_pad128 = ((n_rows + 127) // 128) * 128
    if n_pad128 < bc:
        bc = n_pad128
    n_pad = ((n_rows + bc - 1) // bc) * bc
    if n_pad > n_rows:
        xT = jnp.pad(xT, ((0, 0), (0, n_pad - n_rows)))

    grid = (n_pad // bc,)
    full = lambda i: (0, 0)

    gatesT = pl.pallas_call(
        _router_kernel,
        out_shape=jax.ShapeDtypeStruct((num_experts, n_pad), jnp.float32),
        grid_spec=pltpu.PrefetchScalarGridSpec(
            num_scalar_prefetch=0,
            grid=grid,
            in_specs=[
                pl.BlockSpec((D, bc), lambda i: (0, i)),            # x^T columns
                pl.BlockSpec((D, 1), full),                          # LN1 gamma
                pl.BlockSpec((D, 1), full),                          # LN1 beta
                pl.BlockSpec((hidden, D), full),                     # W1 (out, in)
                pl.BlockSpec((hidden, 1), full),                     # b1
                pl.BlockSpec((hidden, 1), full),                     # LN2 gamma
                pl.BlockSpec((hidden, 1), full),                     # LN2 beta
                pl.BlockSpec((num_experts, hidden), full),           # W2 (out, in)
                pl.BlockSpec((num_experts, 1), full),                # b2
            ],
            out_specs=pl.BlockSpec((num_experts, bc), lambda i: (0, i)),
        ),
        compiler_params=pltpu.CompilerParams(
            dimension_semantics=("parallel",)),
    )(xT, g1, b1, w1t, c1, g2, b2, w2t, c2)

    gates2d = gatesT[:, :n_rows].T                   # (n_rows, E), lane-dense store inside kernel
    return gates2d.reshape(B, H, S, num_experts)


def init_params(key, input_dim, hidden_size, num_experts):
    """Deterministic init matching the module's _init_weights:
    Linear: xavier_uniform(gain=0.1), bias=0.  LayerNorm: weight=1, bias=0.
    Weights are stored as (out, in) (torch layout) for the column-major kernel;
    per-feature vectors are stored as (features, 1) columns."""
    k1, k2 = jax.random.split(key)

    def xavier_uniform(k, fan_out, fan_in, gain=0.1):
        bound = gain * jnp.sqrt(6.0 / (fan_in + fan_out))
        return jax.random.uniform(k, (fan_out, fan_in), jnp.float32, -bound, bound)

    g1 = jnp.ones((input_dim, 1), jnp.float32)
    b1 = jnp.zeros((input_dim, 1), jnp.float32)
    w1t = xavier_uniform(k1, hidden_size, input_dim)
    c1 = jnp.zeros((hidden_size, 1), jnp.float32)
    g2 = jnp.ones((hidden_size, 1), jnp.float32)
    b2 = jnp.zeros((hidden_size, 1), jnp.float32)
    w2t = xavier_uniform(k2, num_experts, hidden_size)
    c2 = jnp.zeros((num_experts, 1), jnp.float32)
    return (g1, b1, w1t, c1, g2, b2, w2t, c2)


if __name__ == "__main__":
    # config: multimodal.hidden_size=64, num_attention_heads=4 -> head_dim=16,
    # input_dim = head_dim*2 = 32; router.hidden_size=32; expert.num_experts=4.
    B, H, S = 2, 4, 8
    head_dim = 16
    input_dim = head_dim * 2
    hidden_size = 32
    num_experts = 4

    key = jax.random.PRNGKey(0)
    kx, kp = jax.random.split(key)
    x = jax.random.normal(kx, (B, H, S, input_dim), jnp.float32)
    params = init_params(kp, input_dim, hidden_size, num_experts)

    gates = expert_router_forward(x, params)
    gates = jax.block_until_ready(gates)

    assert gates.shape == (B, H, S, num_experts)
    assert bool(jnp.all(jnp.isfinite(gates)))
    assert bool(jnp.all(gates >= 1e-6)) and bool(jnp.all(gates <= 1.0))
    # rows of softmax should sum to ~1 (approx reciprocal + clamp barely perturb them)
    assert bool(jnp.all(jnp.abs(jnp.sum(gates, axis=-1) - 1.0) < 1e-2))
    # balance_loss / gumbel / dropout-noise branches are training-only;
    # forward(training=False) returns (gates, None).
    print("KERNEL_OK")
</pallas_src>

<mosaic_0001>
module attributes {stable_mosaic.version = 11 : i64} {
  func.func @_router_kernel(%arg0: i32, %arg1: memref<32x128xf32, #tpu.memory_space<vmem>>, %arg2: memref<32x1xf32, #tpu.memory_space<vmem>>, %arg3: memref<32x1xf32, #tpu.memory_space<vmem>>, %arg4: memref<32x32xf32, #tpu.memory_space<vmem>>, %arg5: memref<32x1xf32, #tpu.memory_space<vmem>>, %arg6: memref<32x1xf32, #tpu.memory_space<vmem>>, %arg7: memref<32x1xf32, #tpu.memory_space<vmem>>, %arg8: memref<4x32xf32, #tpu.memory_space<vmem>>, %arg9: memref<4x1xf32, #tpu.memory_space<vmem>>, %arg10: memref<4x128xf32, #tpu.memory_space<vmem>>) attributes {dimension_semantics = [#tpu.dimension_semantics<parallel>], iteration_bounds = array<i64: 1>, scalar_prefetch = 0 : i64, scratch_operands = 0 : i64, tpu.core_type = #tpu.core_type<tc>, window_params = [{transform_indices = @transform_0, window_bounds = array<i64: 32, 128>}, {pipeline_mode = #tpu.pipeline_mode<synchronous>, transform_indices = @transform_1, window_bounds = array<i64: 32, 1>}, {pipeline_mode = #tpu.pipeline_mode<synchronous>, transform_indices = @transform_2, window_bounds = array<i64: 32, 1>}, {pipeline_mode = #tpu.pipeline_mode<synchronous>, transform_indices = @transform_3, window_bounds = array<i64: 32, 32>}, {pipeline_mode = #tpu.pipeline_mode<synchronous>, transform_indices = @transform_4, window_bounds = array<i64: 32, 1>}, {pipeline_mode = #tpu.pipeline_mode<synchronous>, transform_indices = @transform_5, window_bounds = array<i64: 32, 1>}, {pipeline_mode = #tpu.pipeline_mode<synchronous>, transform_indices = @transform_6, window_bounds = array<i64: 32, 1>}, {pipeline_mode = #tpu.pipeline_mode<synchronous>, transform_indices = @transform_7, window_bounds = array<i64: 4, 32>}, {pipeline_mode = #tpu.pipeline_mode<synchronous>, transform_indices = @transform_8, window_bounds = array<i64: 4, 1>}, {transform_indices = @transform_9, window_bounds = array<i64: 4, 128>}]} {
    %c0 = arith.constant 0 : index
    %c0_0 = arith.constant 0 : index
    %0 = vector.load %arg1[%c0, %c0_0] : memref<32x128xf32, #tpu.memory_space<vmem>>, vector<32x128xf32>
    %1 = arith.mulf %0, %0 : vector<32x128xf32>
    %cst = arith.constant dense<0.000000e+00> : vector<128xf32>
    %2 = vector.multi_reduction <add>, %1, %cst [0] : vector<32x128xf32> to vector<128xf32>
    %3 = vector.shape_cast %2 : vector<128xf32> to vector<1x128xf32>
    %cst_1 = arith.constant 1.000000e-24 : f32
    %4 = vector.broadcast %cst_1 : f32 to vector<1x128xf32>
    %5 = arith.maximumf %3, %4 : vector<1x128xf32>
    %6 = math.rsqrt %5 : vector<1x128xf32>
    %7 = vector.broadcast %6 : vector<1x128xf32> to vector<32x128xf32>
    %8 = arith.mulf %0, %7 : vector<32x128xf32>
    %cst_2 = arith.constant dense<0.000000e+00> : vector<128xf32>
    %9 = vector.multi_reduction <add>, %8, %cst_2 [0] : vector<32x128xf32> to vector<128xf32>
    %10 = vector.shape_cast %9 : vector<128xf32> to vector<1x128xf32>
    %cst_3 = arith.constant 3.200000e+01 : f32
    %11 = vector.broadcast %cst_3 : f32 to vector<1x128xf32>
    %12 = arith.divf %10, %11 : vector<1x128xf32>
    %13 = vector.broadcast %12 : vector<1x128xf32> to vector<32x128xf32>
    %14 = arith.subf %8, %13 : vector<32x128xf32>
    %15 = arith.mulf %14, %14 : vector<32x128xf32>
    %cst_4 = arith.constant dense<0.000000e+00> : vector<128xf32>
    %16 = vector.multi_reduction <add>, %15, %cst_4 [0] : vector<32x128xf32> to vector<128xf32>
    %17 = vector.shape_cast %16 : vector<128xf32> to vector<1x128xf32>
    %cst_5 = arith.constant 3.200000e+01 : f32
    %18 = vector.broadcast %cst_5 : f32 to vector<1x128xf32>
    %19 = arith.divf %17, %18 : vector<1x128xf32>
    %cst_6 = arith.constant 9.99999974E-6 : f32
    %20 = vector.broadcast %cst_6 : f32 to vector<1x128xf32>
    %21 = arith.addf %19, %20 : vector<1x128xf32>
    %22 = math.rsqrt %21 : vector<1x128xf32>
    %23 = vector.broadcast %22 : vector<1x128xf32> to vector<32x128xf32>
    %24 = arith.mulf %14, %23 : vector<32x128xf32>
    %c0_7 = arith.constant 0 : index
    %c0_8 = arith.constant 0 : index
    %25 = vector.load %arg2[%c0_7, %c0_8] : memref<32x1xf32, #tpu.memory_space<vmem>>, vector<32x1xf32>
    %26 = vector.broadcast %25 : vector<32x1xf32> to vector<32x128xf32>
    %27 = arith.mulf %24, %26 : vector<32x128xf32>
    %c0_9 = arith.constant 0 : index
    %c0_10 = arith.constant 0 : index
    %28 = vector.load %arg3[%c0_9, %c0_10] : memref<32x1xf32, #tpu.memory_space<vmem>>, vector<32x1xf32>
    %29 = vector.broadcast %28 : vector<32x1xf32> to vector<32x128xf32>
    %30 = arith.addf %27, %29 : vector<32x128xf32>
    %c0_11 = arith.constant 0 : index
    %c0_12 = arith.constant 0 : index
    %31 = vector.load %arg4[%c0_11, %c0_12] : memref<32x32xf32, #tpu.memory_space<vmem>>, vector<32x32xf32>
    %cst_13 = arith.constant dense<0.000000e+00> : vector<32x128xf32>
    %32 = tpu.matmul %31, %30, %cst_13 {dimension_numbers = #tpu.dot_dimension_numbers<[1], [0], [0], [1], [0, 0, 1, 1], [], []>} : vector<32x32xf32>, vector<32x128xf32>, vector<32x128xf32> -> vector<32x128xf32>
    %c0_14 = arith.constant 0 : index
    %c0_15 = arith.constant 0 : index
    %33 = vector.load %arg5[%c0_14, %c0_15] : memref<32x1xf32, #tpu.memory_space<vmem>>, vector<32x1xf32>
    %34 = vector.broadcast %33 : vector<32x1xf32> to vector<32x128xf32>
    %35 = arith.addf %32, %34 : vector<32x128xf32>
    %cst_16 = arith.constant 5.000000e-01 : f32
    %36 = vector.broadcast %cst_16 : f32 to vector<32x128xf32>
    %37 = arith.mulf %36, %35 : vector<32x128xf32>
    %cst_17 = arith.constant 0.707106769 : f32
    %38 = vector.broadcast %cst_17 : f32 to vector<32x128xf32>
    %39 = arith.mulf %35, %38 : vector<32x128xf32>
    %40 = math.erf %39 : vector<32x128xf32>
    %cst_18 = arith.constant 1.000000e+00 : f32
    %41 = vector.broadcast %cst_18 : f32 to vector<32x128xf32>
    %42 = arith.addf %41, %40 : vector<32x128xf32>
    %43 = arith.mulf %37, %42 : vector<32x128xf32>
    %cst_19 = arith.constant dense<0.000000e+00> : vector<128xf32>
    %44 = vector.multi_reduction <add>, %43, %cst_19 [0] : vector<32x128xf32> to vector<128xf32>
    %45 = vector.shape_cast %44 : vector<128xf32> to vector<1x128xf32>
    %cst_20 = arith.constant 3.200000e+01 : f32
    %46 = vector.broadcast %cst_20 : f32 to vector<1x128xf32>
    %47 = arith.divf %45, %46 : vector<1x128xf32>
    %48 = vector.broadcast %47 : vector<1x128xf32> to vector<32x128xf32>
    %49 = arith.subf %43, %48 : vector<32x128xf32>
    %50 = arith.mulf %49, %49 : vector<32x128xf32>
    %cst_21 = arith.constant dense<0.000000e+00> : vector<128xf32>
    %51 = vector.multi_reduction <add>, %50, %cst_21 [0] : vector<32x128xf32> to vector<128xf32>
    %52 = vector.shape_cast %51 : vector<128xf32> to vector<1x128xf32>
    %cst_22 = arith.constant 3.200000e+01 : f32
    %53 = vector.broadcast %cst_22 : f32 to vector<1x128xf32>
    %54 = arith.divf %52, %53 : vector<1x128xf32>
    %cst_23 = arith.constant 9.99999974E-6 : f32
    %55 = vector.broadcast %cst_23 : f32 to vector<1x128xf32>
    %56 = arith.addf %54, %55 : vector<1x128xf32>
    %57 = math.rsqrt %56 : vector<1x128xf32>
    %58 = vector.broadcast %57 : vector<1x128xf32> to vector<32x128xf32>
    %59 = arith.mulf %49, %58 : vector<32x128xf32>
    %c0_24 = arith.constant 0 : index
    %c0_25 = arith.constant 0 : index
    %60 = vector.load %arg6[%c0_24, %c0_25] : memref<32x1xf32, #tpu.memory_space<vmem>>, vector<32x1xf32>
    %61 = vector.broadcast %60 : vector<32x1xf32> to vector<32x128xf32>
    %62 = arith.mulf %59, %61 : vector<32x128xf32>
    %c0_26 = arith.constant 0 : index
    %c0_27 = arith.constant 0 : index
    %63 = vector.load %arg7[%c0_26, %c0_27] : memref<32x1xf32, #tpu.memory_space<vmem>>, vector<32x1xf32>
    %64 = vector.broadcast %63 : vector<32x1xf32> to vector<32x128xf32>
    %65 = arith.addf %62, %64 : vector<32x128xf32>
    %c0_28 = arith.constant 0 : index
    %c0_29 = arith.constant 0 : index
    %66 = vector.load %arg8[%c0_28, %c0_29] : memref<4x32xf32, #tpu.memory_space<vmem>>, vector<4x32xf32>
    %cst_30 = arith.constant dense<0.000000e+00> : vector<4x128xf32>
    %67 = tpu.matmul %66, %65, %cst_30 {dimension_numbers = #tpu.dot_dimension_numbers<[1], [0], [0], [1], [0, 0, 1, 1], [], []>} : vector<4x32xf32>, vector<32x128xf32>, vector<4x128xf32> -> vector<4x128xf32>
    %c0_31 = arith.constant 0 : index
    %c0_32 = arith.constant 0 : index
    %68 = vector.load %arg9[%c0_31, %c0_32] : memref<4x1xf32, #tpu.memory_space<vmem>>, vector<4x1xf32>
    %69 = vector.broadcast %68 : vector<4x1xf32> to vector<4x128xf32>
    %70 = arith.addf %67, %69 : vector<4x128xf32>
    %cst_33 = arith.constant 1.000000e+01 : f32
    %71 = vector.broadcast %cst_33 : f32 to vector<4x128xf32>
    %72 = arith.mulf %70, %71 : vector<4x128xf32>
    %cst_34 = arith.constant dense<0xFF800000> : vector<128xf32>
    %73 = vector.multi_reduction <maximumf>, %72, %cst_34 [0] : vector<4x128xf32> to vector<128xf32>
    %74 = vector.shape_cast %73 : vector<128xf32> to vector<1x128xf32>
    %75 = vector.broadcast %74 : vector<1x128xf32> to vector<4x128xf32>
    %76 = arith.subf %72, %75 : vector<4x128xf32>
    %77 = math.exp %76 : vector<4x128xf32>
    %cst_35 = arith.constant dense<0.000000e+00> : vector<128xf32>
    %78 = vector.multi_reduction <add>, %77, %cst_35 [0] : vector<4x128xf32> to vector<128xf32>
    %79 = vector.shape_cast %78 : vector<128xf32> to vector<1x128xf32>
    %80 = tpu.reciprocal %79 {approx = true} : vector<1x128xf32> -> vector<1x128xf32>
    %81 = vector.broadcast %80 : vector<1x128xf32> to vector<4x128xf32>
    %82 = arith.mulf %77, %81 : vector<4x128xf32>
    %cst_36 = arith.constant 9.99999997E-7 : f32
    %cst_37 = arith.constant 1.000000e+00 : f32
    %83 = vector.broadcast %cst_36 : f32 to vector<4x128xf32>
    %84 = arith.maximumf %83, %82 : vector<4x128xf32>
    %85 = vector.broadcast %cst_37 : f32 to vector<4x128xf32>
    %86 = arith.minimumf %85, %84 : vector<4x128xf32>
    %c0_38 = arith.constant 0 : index
    %c0_39 = arith.constant 0 : index
    %87 = vector.load %arg10[%c0_38, %c0_39] : memref<4x128xf32, #tpu.memory_space<vmem>>, vector<4x128xf32>
    tpu.vector_store %arg10[%c0_38, %c0_39], %86 {strides = array<i32>} : memref<4x128xf32, #tpu.memory_space<vmem>>, vector<4x128xf32>,
    return
  }
  func.func @transform_0(%arg0: i32) -> (i32, i32) {
    %c0_i32 = arith.constant 0 : i32
    %c0_i32_0 = arith.constant 0 : i32
    return %c0_i32, %arg0 : i32, i32
  }
  func.func @transform_1(%arg0: i32) -> (i32, i32) {
    %c0_i32 = arith.constant 0 : i32
    %c0_i32_0 = arith.constant 0 : i32
    %c0_i32_1 = arith.constant 0 : i32
    return %c0_i32, %c0_i32_0 : i32, i32
  }
  func.func @transform_2(%arg0: i32) -> (i32, i32) {
    %c0_i32 = arith.constant 0 : i32
    %c0_i32_0 = arith.constant 0 : i32
    %c0_i32_1 = arith.constant 0 : i32
    return %c0_i32, %c0_i32_0 : i32, i32
  }
  func.func @transform_3(%arg0: i32) -> (i32, i32) {
    %c0_i32 = arith.constant 0 : i32
    %c0_i32_0 = arith.constant 0 : i32
    %c0_i32_1 = arith.constant 0 : i32
    return %c0_i32, %c0_i32_0 : i32, i32
  }
  func.func @transform_4(%arg0: i32) -> (i32, i32) {
    %c0_i32 = arith.constant 0 : i32
    %c0_i32_0 = arith.constant 0 : i32
    %c0_i32_1 = arith.constant 0 : i32
    return %c0_i32, %c0_i32_0 : i32, i32
  }
  func.func @transform_5(%arg0: i32) -> (i32, i32) {
    %c0_i32 = arith.constant 0 : i32
    %c0_i32_0 = arith.constant 0 : i32
    %c0_i32_1 = arith.constant 0 : i32
    return %c0_i32, %c0_i32_0 : i32, i32
  }
  func.func @transform_6(%arg0: i32) -> (i32, i32) {
    %c0_i32 = arith.constant 0 : i32
    %c0_i32_0 = arith.constant 0 : i32
    %c0_i32_1 = arith.constant 0 : i32
    return %c0_i32, %c0_i32_0 : i32, i32
  }
  func.func @transform_7(%arg0: i32) -> (i32, i32) {
    %c0_i32 = arith.constant 0 : i32
    %c0_i32_0 = arith.constant 0 : i32
    %c0_i32_1 = arith.constant 0 : i32
    return %c0_i32, %c0_i32_0 : i32, i32
  }
  func.func @transform_8(%arg0: i32) -> (i32, i32) {
    %c0_i32 = arith.constant 0 : i32
    %c0_i32_0 = arith.constant 0 : i32
    %c0_i32_1 = arith.constant 0 : i32
    return %c0_i32, %c0_i32_0 : i32, i32
  }
  func.func @transform_9(%arg0: i32) -> (i32, i32) {
    %c0_i32 = arith.constant 0 : i32
    %c0_i32_0 = arith.constant 0 : i32
    return %c0_i32, %arg0 : i32, i32
  }
}

</mosaic_0001>

<llo_original>
// kernel: expert_router_forward.1
$region0: #{expert_router_forward.1}
  #allocation0 [shape = 'u32[]', space=smem, size = 0x4, offset = 0x4, fixed_abs, tag = 'smem constant byte address 0x4 - core index']
  #allocation1 [shape = 'u32[144,128]{1,0:T(1,128)}', space=vmem, size = 0x12000, scoped, tag = 'internal scratch']
  %s0 = inlined_call_operand.vmem [shape: f32[32,128], index: 0, kind: input, shape index: {}]
  %s1 = inlined_call_operand.vmem [shape: f32[32,1], index: 1, kind: input, shape index: {}]
  %s2 = inlined_call_operand.vmem [shape: f32[32,1], index: 2, kind: input, shape index: {}]
  %s3 = inlined_call_operand.vmem [shape: f32[32,32], index: 3, kind: input, shape index: {}]
  %s4 = inlined_call_operand.vmem [shape: f32[32,1], index: 4, kind: input, shape index: {}]
  %s5 = inlined_call_operand.vmem [shape: f32[32,1], index: 5, kind: input, shape index: {}]
  %s6 = inlined_call_operand.vmem [shape: f32[32,1], index: 6, kind: input, shape index: {}]
  %s7 = inlined_call_operand.vmem [shape: f32[4,32], index: 7, kind: input, shape index: {}]
  %s8 = inlined_call_operand.vmem [shape: f32[4,1], index: 8, kind: input, shape index: {}]
  %s9 = inlined_call_operand.vmem [shape: f32[4,128], index: 9, kind: output, shape index: {}]
  %s10 = sld [smem:[#allocation0]]
  $region46: #{expert_router_forward.1} parent=0
    _
  %s12 = ssub.s32 1, %s10
  %s13 = scalar_select 0, %s12, %s10
  // Predicated region
  $region2: #{expert_router_forward.1} parent=0 // pred_check
    _
  $region3: #{expert_router_forward.1} parent=0 // pred_check_branch
    %15 = sbr.rel (0) target = $region5
  $region4: #{expert_router_forward.1} parent=0 // pred_region
    _
  $region5: #{expert_router_forward.1} parent=0 // pred_fallthru
    _
  // Predicated region
  $region6: #{expert_router_forward.1} parent=0 // pred_check
    _
  $region7: #{expert_router_forward.1} parent=0 // pred_check_branch
    %17 = sbr.rel (0) target = $region9
  $region8: #{expert_router_forward.1} parent=0 // pred_region
    _
  $region9: #{expert_router_forward.1} parent=0 // pred_fallthru
    _
  // Predicated region
  $region10: #{expert_router_forward.1} parent=0 // pred_check
    _
  $region11: #{expert_router_forward.1} parent=0 // pred_check_branch
    %19 = sbr.rel (0) target = $region13
  $region12: #{expert_router_forward.1} parent=0 // pred_region
    _
  $region13: #{expert_router_forward.1} parent=0 // pred_fallthru
    _
  // Predicated region
  $region14: #{expert_router_forward.1} parent=0 // pred_check
    _
  $region15: #{expert_router_forward.1} parent=0 // pred_check_branch
    %21 = sbr.rel (0) target = $region17
  $region16: #{expert_router_forward.1} parent=0 // pred_region
    _
  $region17: #{expert_router_forward.1} parent=0 // pred_fallthru
    _
  // Predicated region
  $region18: #{expert_router_forward.1} parent=0 // pred_check
    _
  $region19: #{expert_router_forward.1} parent=0 // pred_check_branch
    %23 = sbr.rel (0) target = $region21
  $region20: #{expert_router_forward.1} parent=0 // pred_region
    _
  $region21: #{expert_router_forward.1} parent=0 // pred_fallthru
    _
  // Predicated region
  $region22: #{expert_router_forward.1} parent=0 // pred_check
    _
  $region23: #{expert_router_forward.1} parent=0 // pred_check_branch
    %25 = sbr.rel (0) target = $region25
  $region24: #{expert_router_forward.1} parent=0 // pred_region
    _
  $region25: #{expert_router_forward.1} parent=0 // pred_fallthru
    _
  // Predicated region
  $region26: #{expert_router_forward.1} parent=0 // pred_check
    _
  $region27: #{expert_router_forward.1} parent=0 // pred_check_branch
    %27 = sbr.rel (0) target = $region29
  $region28: #{expert_router_forward.1} parent=0 // pred_region
    _
  $region29: #{expert_router_forward.1} parent=0 // pred_fallthru
    _
  // Predicated region
  $region30: #{expert_router_forward.1} parent=0 // pred_check
    _
  $region31: #{expert_router_forward.1} parent=0 // pred_check_branch
    %29 = sbr.rel (0) target = $region33
  $region32: #{expert_router_forward.1} parent=0 // pred_region
    _
  $region33: #{expert_router_forward.1} parent=0 // pred_fallthru
    _
  // Predicated region
  $region34: #{expert_router_forward.1} parent=0 // pred_check
    _
  $region35: #{expert_router_forward.1} parent=0 // pred_check_branch
    %31 = sbr.rel (0) target = $region37
  $region36: #{expert_router_forward.1} parent=0 // pred_region
    _
  $region37: #{expert_router_forward.1} parent=0 // pred_fallthru
    _
  %v32 = vld [vmem:[%s0] sm:$0xff]
  %v33 = vld [vmem:[%s0 + $0x8] sm:$0xff]
  %v34 = vld [vmem:[%s0 + $0x10] sm:$0xff]
  %v35 = vld [vmem:[%s0 + $0x18] sm:$0xff]
  %v36 = vmul.f32 %v32, %v32
  %v37 = vmul.f32 %v33, %v33
  %v38 = vmul.f32 %v34, %v34
  %v39 = vmul.f32 %v35, %v35
  %v40 = vadd.f32 %v36, %v37
  %v41 = vadd.f32 %v40, %v38
  %v42 = vadd.f32 %v41, %v39
  %v43 = vrot.slane %v42, 4
  %v44 = vadd.f32 %v42, %v43
  %v45 = vrot.slane %v44, 2
  %v46 = vadd.f32 %v44, %v45
  %v47 = vrot.slane %v46, 1
  %v48 = vadd.f32 %v46, %v47
  %v49 = vmax.f32 %v48, 1e-24
  %v50 = vrsqrt.pop %v49
  %v51 = vmul.f32 %v32, %v50
  %v52 = vmul.f32 %v33, %v50
  %v53 = vmul.f32 %v34, %v50
  %v54 = vmul.f32 %v35, %v50
  %v55 = vadd.f32 %v51, %v52
  %v56 = vadd.f32 %v55, %v53
  %v57 = vadd.f32 %v56, %v54
  %v58 = vrot.slane %v57, 4
  %v59 = vadd.f32 %v57, %v58
  %v60 = vrot.slane %v59, 2
  %v61 = vadd.f32 %v59, %v60
  %v62 = vrot.slane %v61, 1
  %v63 = vadd.f32 %v61, %v62
  %v64 = vrcp.pop 32.0
  %v65 = vmul.f32 %v63, %v64
  %v66 = vsub.f32 %v51, %v65
  %v67 = vsub.f32 %v52, %v65
  %v68 = vsub.f32 %v53, %v65
  %v69 = vsub.f32 %v54, %v65
  %v70 = vmul.f32 %v66, %v66
  %v71 = vmul.f32 %v67, %v67
  %v72 = vmul.f32 %v68, %v68
  %v73 = vmul.f32 %v69, %v69
  %v74 = vadd.f32 %v70, %v71
  %v75 = vadd.f32 %v74, %v72
  %v76 = vadd.f32 %v75, %v73
  %v77 = vrot.slane %v76, 4
  %v78 = vadd.f32 %v76, %v77
  %v79 = vrot.slane %v78, 2
  %v80 = vadd.f32 %v78, %v79
  %v81 = vrot.slane %v80, 1
  %v82 = vadd.f32 %v80, %v81
  %v83 = vmul.f32 %v82, %v64
  %v84 = vadd.f32 %v83, 1e-05
  %v85 = vrsqrt.pop %v84
  %v86 = vmul.f32 %v66, %v85
  %v87 = vmul.f32 %v67, %v85
  %v88 = vmul.f32 %v68, %v85
  %v89 = vmul.f32 %v69, %v85
  %v90 = vld [vmem:[%s1] sm:$0xff]
  %v91 = vld [vmem:[%s1 + $0x8] sm:$0xff]
  %v92 = vld [vmem:[%s1 + $0x10] sm:$0xff]
  %v93 = vld [vmem:[%s1 + $0x18] sm:$0xff]
  %95 = vset.pattern.permute.xlu0 0
  %96 = vperm.xlu0 %95, %v90
  %v97 = vpop.permute.xlu0 %96
  %100 = vset.pattern.permute.xlu0 0
  %101 = vperm.xlu0 %100, %v91
  %v102 = vpop.permute.xlu0 %101
  %105 = vset.pattern.permute.xlu0 0
  %106 = vperm.xlu0 %105, %v92
  %v107 = vpop.permute.xlu0 %106
  %110 = vset.pattern.permute.xlu0 0
  %111 = vperm.xlu0 %110, %v93
  %v112 = vpop.permute.xlu0 %111
  %v114 = vmul.f32 %v86, %v97
  %v115 = vmul.f32 %v87, %v102
  %v116 = vmul.f32 %v88, %v107
  %v117 = vmul.f32 %v89, %v112
  %v118 = vld [vmem:[%s2] sm:$0xff]
  %v119 = vld [vmem:[%s2 + $0x8] sm:$0xff]
  %v120 = vld [vmem:[%s2 + $0x10] sm:$0xff]
  %v121 = vld [vmem:[%s2 + $0x18] sm:$0xff]
  %123 = vset.pattern.permute.xlu0 0
  %124 = vperm.xlu0 %123, %v118
  %v125 = vpop.permute.xlu0 %124
  %128 = vset.pattern.permute.xlu0 0
  %129 = vperm.xlu0 %128, %v119
  %v130 = vpop.permute.xlu0 %129
  %133 = vset.pattern.permute.xlu0 0
  %134 = vperm.xlu0 %133, %v120
  %v135 = vpop.permute.xlu0 %134
  %138 = vset.pattern.permute.xlu0 0
  %139 = vperm.xlu0 %138, %v121
  %v140 = vpop.permute.xlu0 %139
  %v142 = vadd.f32 %v114, %v125
  %v143 = vadd.f32 %v115, %v130
  %v144 = vadd.f32 %v116, %v135
  %v145 = vadd.f32 %v117, %v140
  %v146 = vld [vmem:[%s3] sm:$0xff]
  %v147 = vld [vmem:[%s3 + $0x8] sm:$0xff]
  %v148 = vld [vmem:[%s3 + $0x10] sm:$0xff]
  %v149 = vld [vmem:[%s3 + $0x18] sm:$0xff]
  %v150 = vld [vmem:[%s4] sm:$0xff]
  %v151 = vld [vmem:[%s4 + $0x8] sm:$0xff]
  %v152 = vld [vmem:[%s4 + $0x10] sm:$0xff]
  %v153 = vld [vmem:[%s4 + $0x18] sm:$0xff]
  %155 = vset.pattern.permute.xlu0 0
  %156 = vperm.xlu0 %155, %v150
  %v157 = vpop.permute.xlu0 %156
  %160 = vset.pattern.permute.xlu0 0
  %161 = vperm.xlu0 %160, %v151
  %v162 = vpop.permute.xlu0 %161
  %165 = vset.pattern.permute.xlu0 0
  %166 = vperm.xlu0 %165, %v152
  %v167 = vpop.permute.xlu0 %166
  %170 = vset.pattern.permute.xlu0 0
  %171 = vperm.xlu0 %170, %v153
  %v172 = vpop.permute.xlu0 %171
  %vm174 = vcmask 261120
  %v176 = vsel %vm174, %v146, 0
  %v179 = vsel %vm174, %v147, 0
  %v182 = vsel %vm174, %v148, 0
  %v185 = vsel %vm174, %v149, 0
  %187 = vmatprep.subr.mxu0 0.0
  %188 = vmatpush1.msra.mxu0 %v142
  %189 = vmatprep.subr.mxu0 0.0
  %190 = vmatpush1.msra.mxu0 %v143
  %191 = vmatprep.subr.mxu0 0.0
  %192 = vmatpush1.msra.mxu0 %v144
  %193 = vmatprep.subr.mxu0 0.0
  %194 = vmatpush1.msra.mxu0 %v145
  %195 = vmatprep.subr.mxu0 0.0
  %196 = vmatpush1.msra.mxu0 0.0
  %197 = vmatprep.subr.mxu0 0.0
  %198 = vmatpush1.msra.mxu0 0.0
  %199 = vmatprep.subr.mxu0 0.0
  %200 = vmatpush1.msra.mxu0 0.0
  %201 = vmatprep.subr.mxu0 0.0
  %202 = vmatpush1.msra.mxu0 0.0
  %203 = vmatprep.subr.mxu0 0.0
  %204 = vmatpush1.msra.mxu0 0.0
  %205 = vmatprep.subr.mxu0 0.0
  %206 = vmatpush1.msra.mxu0 0.0
  %207 = vmatprep.subr.mxu0 0.0
  %208 = vmatpush1.msra.mxu0 0.0
  %209 = vmatprep.subr.mxu0 0.0
  %210 = vmatpush1.msra.mxu0 0.0
  %211 = vmatprep.subr.mxu0 0.0
  %212 = vmatpush1.msra.mxu0 0.0
  %213 = vmatprep.subr.mxu0 0.0
  %214 = vmatpush1.msra.mxu0 0.0
  %215 = vmatprep.subr.mxu0 0.0
  %216 = vmatpush1.msra.mxu0 0.0
  %217 = vmatprep.subr.mxu0 0.0
  %218 = vmatpush1.msra.mxu0 0.0
  %219 = vmatprep.subr.mxu0 0.0
  %220 = vmatpush1.msra.mxu0 0.0
  %221 = vmatprep.subr.mxu0 0.0
  %222 = vmatpush1.msra.mxu0 0.0
  %223 = vmatprep.subr.mxu0 0.0
  %224 = vmatpush1.msra.mxu0 0.0
  %225 = vmatprep.subr.mxu0 0.0
  %226 = vmatpush1.msra.mxu0 0.0
  %227 = vmatprep.subr.mxu0 0.0
  %228 = vmatpush1.msra.mxu0 0.0
  %229 = vmatprep.subr.mxu0 0.0
  %230 = vmatpush1.msra.mxu0 0.0
  %231 = vmatprep.subr.mxu0 0.0
  %232 = vmatpush1.msra.mxu0 0.0
  %233 = vmatprep.subr.mxu0 0.0
  %234 = vmatpush1.msra.mxu0 0.0
  %235 = vmatprep.subr.mxu0 0.0
  %236 = vmatpush1.msra.mxu0 0.0
  %237 = vmatprep.subr.mxu0 0.0
  %238 = vmatpush1.msra.mxu0 0.0
  %239 = vmatprep.subr.mxu0 0.0
  %240 = vmatpush1.msra.mxu0 0.0
  %241 = vmatprep.subr.mxu0 0.0
  %242 = vmatpush1.msra.mxu0 0.0
  %243 = vmatprep.subr.mxu0 0.0
  %244 = vmatpush1.msra.mxu0 0.0
  %245 = vmatprep.subr.mxu0 0.0
  %246 = vmatpush1.msra.mxu0 0.0
  %247 = vmatprep.subr.mxu0 0.0
  %248 = vmatpush1.msra.mxu0 0.0
  %249 = vmatprep.subr.mxu0 0.0
  %250 = vmatpush1.msra.mxu0 0.0
  %251 = vmatprep.mubr.f32.mxu0 0.0
  %252 = vmatmul.mubr.f32.gmra.mrb[0].mxu0 %v176
  %v253 = vpop.f32.mrb[0].mxu0
  %v254 = vadd.f32 %v157, %v253
  %v255 = vpop.f32.mrb[0].mxu0
  %256 = vmatprep.mubr.f32.mxu0 0.0
  %257 = vmatmul.mubr.f32.gmra.mrb[0].mxu0 %v179
  %v258 = vpop.f32.mrb[0].mxu0
  %v259 = vadd.f32 %v162, %v258
  %v260 = vpop.f32.mrb[0].mxu0
  %261 = vmatprep.mubr.f32.mxu0 0.0
  %262 = vmatmul.mubr.f32.gmra.mrb[0].mxu0 %v182
  %v263 = vpop.f32.mrb[0].mxu0
  %v264 = vadd.f32 %v167, %v263
  %v265 = vpop.f32.mrb[0].mxu0
  %266 = vmatprep.mubr.f32.mxu0 0.0
  %267 = vmatmul.mubr.f32.gmra.mrb[0].mxu0 %v185
  %v268 = vpop.f32.mrb[0].mxu0
  %v269 = vadd.f32 %v172, %v268
  %v270 = vpop.f32.mrb[0].mxu0
  %271 = vdwg.mxu0
  %v272 = vmul.f32 %v254, 0.5
  %v273 = vmul.f32 %v259, 0.5
  %v274 = vmul.f32 %v264, 0.5
  %v275 = vmul.f32 %v269, 0.5
  %v276 = vmul.f32 %v254, 0.70710677
  %v277 = vmul.f32 %v259, 0.70710677
  %v278 = vmul.f32 %v264, 0.70710677
  %v279 = vmul.f32 %v269, 0.70710677
  %v280 = verf.f32.pop %v276
  %v281 = verf.f32.pop %v277
  %v282 = verf.f32.pop %v278
  %v283 = verf.f32.pop %v279
  %v284 = vadd.f32 %v280, 1.0
  %v285 = vadd.f32 %v281, 1.0
  %v286 = vadd.f32 %v282, 1.0
  %v287 = vadd.f32 %v283, 1.0
  %v288 = vmul.f32 %v272, %v284
  %v289 = vmul.f32 %v273, %v285
  %v290 = vmul.f32 %v274, %v286
  %v291 = vmul.f32 %v275, %v287
  %v292 = vadd.f32 %v288, %v289
  %v293 = vadd.f32 %v292, %v290
  %v294 = vadd.f32 %v293, %v291
  %v295 = vrot.slane %v294, 4
  %v296 = vadd.f32 %v294, %v295
  %v297 = vrot.slane %v296, 2
  %v298 = vadd.f32 %v296, %v297
  %v299 = vrot.slane %v298, 1
  %v300 = vadd.f32 %v298, %v299
  %v301 = vmul.f32 %v300, %v64
  %v302 = vsub.f32 %v288, %v301
  %v303 = vsub.f32 %v289, %v301
  %v304 = vsub.f32 %v290, %v301
  %v305 = vsub.f32 %v291, %v301
  %v306 = vmul.f32 %v302, %v302
  %v307 = vmul.f32 %v303, %v303
  %v308 = vmul.f32 %v304, %v304
  %v309 = vmul.f32 %v305, %v305
  %v310 = vadd.f32 %v306, %v307
  %v311 = vadd.f32 %v310, %v308
  %v312 = vadd.f32 %v311, %v309
  %v313 = vrot.slane %v312, 4
  %v314 = vadd.f32 %v312, %v313
  %v315 = vrot.slane %v314, 2
  %v316 = vadd.f32 %v314, %v315
  %v317 = vrot.slane %v316, 1
  %v318 = vadd.f32 %v316, %v317
  %v319 = vmul.f32 %v318, %v64
  %v320 = vadd.f32 %v319, 1e-05
  %v321 = vrsqrt.pop %v320
  %v322 = vmul.f32 %v302, %v321
  %v323 = vmul.f32 %v303, %v321
  %v324 = vmul.f32 %v304, %v321
  %v325 = vmul.f32 %v305, %v321
  %v326 = vld [vmem:[%s5] sm:$0xff]
  %v327 = vld [vmem:[%s5 + $0x8] sm:$0xff]
  %v328 = vld [vmem:[%s5 + $0x10] sm:$0xff]
  %v329 = vld [vmem:[%s5 + $0x18] sm:$0xff]
  %331 = vset.pattern.permute.xlu0 0
  %332 = vperm.xlu0 %331, %v326
  %v333 = vpop.permute.xlu0 %332
  %336 = vset.pattern.permute.xlu0 0
  %337 = vperm.xlu0 %336, %v327
  %v338 = vpop.permute.xlu0 %337
  %341 = vset.pattern.permute.xlu0 0
  %342 = vperm.xlu0 %341, %v328
  %v343 = vpop.permute.xlu0 %342
  %346 = vset.pattern.permute.xlu0 0
  %347 = vperm.xlu0 %346, %v329
  %v348 = vpop.permute.xlu0 %347
  %v350 = vmul.f32 %v322, %v333
  %v351 = vmul.f32 %v323, %v338
  %v352 = vmul.f32 %v324, %v343
  %v353 = vmul.f32 %v325, %v348
  %v354 = vld [vmem:[%s6] sm:$0xff]
  %v355 = vld [vmem:[%s6 + $0x8] sm:$0xff]
  %v356 = vld [vmem:[%s6 + $0x10] sm:$0xff]
  %v357 = vld [vmem:[%s6 + $0x18] sm:$0xff]
  %359 = vset.pattern.permute.xlu0 0
  %360 = vperm.xlu0 %359, %v354
  %v361 = vpop.permute.xlu0 %360
  %364 = vset.pattern.permute.xlu0 0
  %365 = vperm.xlu0 %364, %v355
  %v366 = vpop.permute.xlu0 %365
  %369 = vset.pattern.permute.xlu0 0
  %370 = vperm.xlu0 %369, %v356
  %v371 = vpop.permute.xlu0 %370
  %374 = vset.pattern.permute.xlu0 0
  %375 = vperm.xlu0 %374, %v357
  %v376 = vpop.permute.xlu0 %375
  %v378 = vadd.f32 %v350, %v361
  %v379 = vadd.f32 %v351, %v366
  %v380 = vadd.f32 %v352, %v371
  %v381 = vadd.f32 %v353, %v376
  %v382 = vld [vmem:[%s7] sm:$0xf]
  %v383 = vld [vmem:[%s8] sm:$0xf]
  %385 = vset.pattern.permute.xlu0 0
  %386 = vperm.xlu0 %385, %v383
  %v387 = vpop.permute.xlu0 %386
  %v390 = vsel %vm174, %v382, 0
  %392 = vmatprep.subr.mxu0 0.0
  %393 = vmatpush1.msra.mxu0 %v378
  %394 = vmatprep.subr.mxu0 0.0
  %395 = vmatpush1.msra.mxu0 %v379
  %396 = vmatprep.subr.mxu0 0.0
  %397 = vmatpush1.msra.mxu0 %v380
  %398 = vmatprep.subr.mxu0 0.0
  %399 = vmatpush1.msra.mxu0 %v381
  %400 = vmatprep.subr.mxu0 0.0
  %401 = vmatpush1.msra.mxu0 0.0
  %402 = vmatprep.subr.mxu0 0.0
  %403 = vmatpush1.msra.mxu0 0.0
  %404 = vmatprep.subr.mxu0 0.0
  %405 = vmatpush1.msra.mxu0 0.0
  %406 = vmatprep.subr.mxu0 0.0
  %407 = vmatpush1.msra.mxu0 0.0
  %408 = vmatprep.subr.mxu0 0.0
  %409 = vmatpush1.msra.mxu0 0.0
  %410 = vmatprep.subr.mxu0 0.0
  %411 = vmatpush1.msra.mxu0 0.0
  %412 = vmatprep.subr.mxu0 0.0
  %413 = vmatpush1.msra.mxu0 0.0
  %414 = vmatprep.subr.mxu0 0.0
  %415 = vmatpush1.msra.mxu0 0.0
  %416 = vmatprep.subr.mxu0 0.0
  %417 = vmatpush1.msra.mxu0 0.0
  %418 = vmatprep.subr.mxu0 0.0
  %419 = vmatpush1.msra.mxu0 0.0
  %420 = vmatprep.subr.mxu0 0.0
  %421 = vmatpush1.msra.mxu0 0.0
  %422 = vmatprep.subr.mxu0 0.0
  %423 = vmatpush1.msra.mxu0 0.0
  %424 = vmatprep.subr.mxu0 0.0
  %425 = vmatpush1.msra.mxu0 0.0
  %426 = vmatprep.subr.mxu0 0.0
  %427 = vmatpush1.msra.mxu0 0.0
  %428 = vmatprep.subr.mxu0 0.0
  %429 = vmatpush1.msra.mxu0 0.0
  %430 = vmatprep.subr.mxu0 0.0
  %431 = vmatpush1.msra.mxu0 0.0
  %432 = vmatprep.subr.mxu0 0.0
  %433 = vmatpush1.msra.mxu0 0.0
  %434 = vmatprep.subr.mxu0 0.0
  %435 = vmatpush1.msra.mxu0 0.0
  %436 = vmatprep.subr.mxu0 0.0
  %437 = vmatpush1.msra.mxu0 0.0
  %438 = vmatprep.subr.mxu0 0.0
  %439 = vmatpush1.msra.mxu0 0.0
  %440 = vmatprep.subr.mxu0 0.0
  %441 = vmatpush1.msra.mxu0 0.0
  %442 = vmatprep.subr.mxu0 0.0
  %443 = vmatpush1.msra.mxu0 0.0
  %444 = vmatprep.subr.mxu0 0.0
  %445 = vmatpush1.msra.mxu0 0.0
  %446 = vmatprep.subr.mxu0 0.0
  %447 = vmatpush1.msra.mxu0 0.0
  %448 = vmatprep.subr.mxu0 0.0
  %449 = vmatpush1.msra.mxu0 0.0
  %450 = vmatprep.subr.mxu0 0.0
  %451 = vmatpush1.msra.mxu0 0.0
  %452 = vmatprep.subr.mxu0 0.0
  %453 = vmatpush1.msra.mxu0 0.0
  %454 = vmatprep.subr.mxu0 0.0
  %455 = vmatpush1.msra.mxu0 0.0
  %456 = vmatprep.mubr.f32.mxu0 0.0
  %457 = vmatmul.mubr.f32.gmra.mrb[0].mxu0 %v390
  %v458 = vpop.f32.mrb[0].mxu0
  %v459 = vadd.f32 %v387, %v458
  %v460 = vpop.f32.mrb[0].mxu0
  %461 = vdwg.mxu0
  %v462 = vmul.f32 %v459, 10.0
  %vm463 = vcmask 1043456
  %v464 = vsel %vm463, %v462, -inf
  %v465 = vrot.slane %v464, 4
  %v466 = vmax.f32 %v464, %v465
  %v467 = vrot.slane %v466, 2
  %v468 = vmax.f32 %v466, %v467
  %v469 = vrot.slane %v468, 1
  %v470 = vmax.f32 %v468, %v469
  %v471 = vsub.f32 %v462, %v470
  %v472 = vmul.f32 %v471, 1.442695
  %v473 = vpow.pop %v472
  %v474 = vsel %vm463, %v473, 0.0
  %v475 = vrot.slane %v474, 4
  %v476 = vadd.f32 %v474, %v475
  %v477 = vrot.slane %v476, 2
  %v478 = vadd.f32 %v476, %v477
  %v479 = vrot.slane %v478, 1
  %v480 = vadd.f32 %v478, %v479
  %v481 = vrcp.pop %v480
  %v482 = vmul.f32 %v473, %v481
  %v483 = vmax.f32 %v482, 1e-06
  %v484 = vmin.f32 %v483, 1.0
  %485 = vst [vmem:[%s9] sm:$0xf] %v484
  // Predicated region
  $region38: #{expert_router_forward.1} parent=0 // pred_check
    _
  $region39: #{expert_router_forward.1} parent=0 // pred_check_branch
    %487 = sbr.rel (0) target = $region41
  $region40: #{expert_router_forward.1} parent=0 // pred_region
    _
  $region41: #{expert_router_forward.1} parent=0 // pred_fallthru
    _
  // Predicated region
  $region42: #{expert_router_forward.1} parent=0 // pred_check
    _
  $region43: #{expert_router_forward.1} parent=0 // pred_check_branch
    %489 = sbr.rel (0) target = $region45
  $region44: #{expert_router_forward.1} parent=0 // pred_region
    _
  $region45: #{expert_router_forward.1} parent=0 // pred_fallthru
    _

</llo_original>
